<compile_context>
chip_gen: v6e
topology: v6e:2x2x1
jax: 0.10.0
libtpu: 0.0.40
codegen_flags: <defaults>
</compile_context>

<pallas_src>
import functools

import jax
import jax.numpy as jnp
from jax.experimental import pallas as pl
from jax.experimental.pallas import tpu as pltpu


def _round_up(x, m):
    return ((x + m - 1) // m) * m


def _pos_emb_kernel(pos_ref, inv_ref, out_ref, *, fold, half):
    # pos_ref: (tile_r, fold)        f32 — `fold` consecutive positions per row.
    # inv_ref: (1, half)             f32 — inverse frequencies, resident across grid.
    # out_ref: (tile_r, fold*2*half) — per folded position: [sin(half) | cos(half)].
    pos = pos_ref[...]
    inv = inv_ref[...]
    pieces = []
    for j in range(fold):
        arg = pos[:, j:j + 1] * inv          # broadcast outer product -> (tile_r, half)
        pieces.append(jnp.sin(arg))
        pieces.append(jnp.cos(arg))
    # Assemble the full row in registers (XLU lane placement, idle unit) and issue
    # ONE lane-dense store instead of 2*fold masked partial stores.
    out_ref[...] = jnp.concatenate(pieces, axis=-1).astype(out_ref.dtype)


def _choose_tile_rows(n_rows, row_w, out_itemsize, max_tile_rows=None):
    """Folded rows per grid step.

    Multiple of the dtype's sublane packing (8 rows f32, 16 rows bf16), ~4 MiB of
    output per step (amortizes ~0.35 us/step pipeline overhead, ~85%+ of the HBM
    roofline), and >= 2 grid steps when there is enough work so v7x's two
    TensorCores can split the "parallel" axis.
    """
    row_align = 8 * max(1, 4 // out_itemsize)
    bytes_per_row = row_w * out_itemsize
    tile = max(row_align, (4 * 1024 * 1024) // bytes_per_row)
    if max_tile_rows is not None:
        tile = min(tile, max_tile_rows)
    tile = max(row_align, (tile // row_align) * row_align)
    tile = min(tile, _round_up(n_rows, row_align))        # never bigger than one pass
    if n_rows >= 2 * row_align:                            # keep >= 2 steps (v7x 2 TCs)
        tile = min(tile, max(row_align, _round_up(pl.cdiv(n_rows, 2), row_align)))
    return max(row_align, tile)


def positional_embedding(positions, dim, *, out_dtype=jnp.float32, max_tile_rows=None):
    """positions: (L,) array (any real dtype). Returns (L, 1, dim) of `out_dtype`."""
    assert dim % 2 == 0, "dim must be even"
    L = positions.shape[0]
    half = dim // 2
    out_itemsize = jnp.dtype(out_dtype).itemsize

    # Matches the torch buffer built in __init__.
    inv_freq = 1.0 / (10000.0 ** (jnp.arange(0.0, dim, 2.0, dtype=jnp.float32) / dim))

    # Lane-dense fold: pack `fold` consecutive positions per kernel row so the
    # stored row is fold*dim >= 128 lanes wide. The (n_rows, fold*dim) result is a
    # free row-major reshape of (L_pad, dim).
    fold = 128 // dim if (dim < 128 and 128 % dim == 0) else 1
    row_w = fold * dim
    n_rows = pl.cdiv(L, fold)                              # folded rows actually needed

    tile_r = _choose_tile_rows(n_rows, row_w, out_itemsize, max_tile_rows)
    grid_r = pl.cdiv(n_rows, tile_r)

    # Pad only the (tiny) positions input so every INPUT block is fully in bounds;
    # the OUTPUT keeps its exact (n_rows, row_w) shape and Pallas masks the partial
    # boundary block — no post-kernel full-size slice/copy.
    rows_padded = grid_r * tile_r
    pos_f = positions.astype(jnp.float32)
    pad = rows_padded * fold - L
    if pad:
        pos_f = jnp.pad(pos_f, (0, pad))
    pos_2d = pos_f.reshape(rows_padded, fold)
    inv_2d = inv_freq.reshape(1, half)

    out = pl.pallas_call(
        functools.partial(_pos_emb_kernel, fold=fold, half=half),
        out_shape=jax.ShapeDtypeStruct((n_rows, row_w), out_dtype),
        grid=(grid_r,),
        in_specs=[
            pl.BlockSpec((tile_r, fold), lambda i: (i, 0)),   # positions tile
            pl.BlockSpec((1, half), lambda i: (0, 0)),        # inv_freq, resident
        ],
        out_specs=pl.BlockSpec((tile_r, row_w), lambda i: (i, 0)),
        compiler_params=pltpu.CompilerParams(
            dimension_semantics=("parallel",),            # v7x: split grid over 2 TCs
            vmem_limit_bytes=32 * 1024 * 1024,            # headroom over v5e's 16 MiB default
        ),
        cost_estimate=pl.CostEstimate(
            flops=n_rows * row_w,
            transcendentals=n_rows * row_w,
            bytes_accessed=n_rows * row_w * out_itemsize
            + rows_padded * fold * 4 + half * 4,
        ),
    )(pos_2d, inv_2d)

    emb = out.reshape(n_rows * fold, dim)                  # free row-major reshape
    if n_rows * fold != L:
        # Only when dim < 128 and L % fold != 0: drop the < fold padded tail rows.
        emb = emb[:L]
    return emb.reshape(L, 1, dim)                          # pos_emb[:, None, :]


def _reference(positions, dim):
    inv_freq = 1.0 / (10000.0 ** (jnp.arange(0.0, dim, 2.0, dtype=jnp.float32) / dim))
    sinusoid = jnp.einsum("i,j->ij", positions.astype(jnp.float32), inv_freq)
    return jnp.concatenate([jnp.sin(sinusoid), jnp.cos(sinusoid)], axis=-1)[:, None, :]


if __name__ == "__main__":
    key = jax.random.PRNGKey(0)

    # Case 1: small module-sized test (seq=8, dim=32) — dim<128 lane-dense fold (k=4).
    seq, dim = 8, 32
    positions = jax.random.uniform(
        key, (seq,), dtype=jnp.float32, minval=0.0, maxval=100.0
    )
    out = positional_embedding(positions, dim)
    jax.block_until_ready(out)
    ref = _reference(positions, dim)
    assert out.shape == (seq, 1, dim), out.shape
    assert jnp.allclose(out, ref, atol=1e-5, rtol=1e-5), "mismatch vs reference (1)"

    # Case 2: ragged L with dim >= 128 (no fold); 2-step grid with a masked
    # partial boundary output block (no post-kernel slice copy).
    seq2, dim2 = 37, 256
    positions2 = jnp.arange(seq2, dtype=jnp.float32)
    out2 = positional_embedding(positions2, dim2)
    jax.block_until_ready(out2)
    ref2 = _reference(positions2, dim2)
    assert out2.shape == (seq2, 1, dim2), out2.shape
    assert jnp.allclose(out2, ref2, atol=1e-5, rtol=1e-5), "mismatch vs reference (2)"

    # Case 3: multi-step grid + fold + L not a multiple of the fold factor.
    seq3, dim3 = 50, 32
    positions3 = jax.random.uniform(
        jax.random.PRNGKey(0), (seq3,), dtype=jnp.float32, minval=0.0, maxval=50.0
    )
    out3 = positional_embedding(positions3, dim3, max_tile_rows=8)
    jax.block_until_ready(out3)
    ref3 = _reference(positions3, dim3)
    assert out3.shape == (seq3, 1, dim3), out3.shape
    assert jnp.allclose(out3, ref3, atol=1e-5, rtol=1e-5), "mismatch vs reference (3)"

    # Case 4: optional bf16 output mode (halves HBM writeback); loose tolerance.
    seq4, dim4 = 48, 128
    positions4 = jnp.arange(seq4, dtype=jnp.float32)
    out4 = positional_embedding(positions4, dim4, out_dtype=jnp.bfloat16)
    jax.block_until_ready(out4)
    ref4 = _reference(positions4, dim4)
    assert out4.shape == (seq4, 1, dim4), out4.shape
    assert out4.dtype == jnp.bfloat16
    assert jnp.allclose(out4.astype(jnp.float32), ref4, atol=2e-2, rtol=0.0), \
        "mismatch vs reference (4, bf16)"

    print("KERNEL_OK")
</pallas_src>

<mosaic_0001>
module attributes {stable_mosaic.version = 11 : i64} {
  func.func @_pos_emb_kernel(%arg0: i32, %arg1: memref<8x4xf32, #tpu.memory_space<vmem>>, %arg2: memref<1x16xf32, #tpu.memory_space<vmem>>, %arg3: memref<8x128xf32, #tpu.memory_space<vmem>>) attributes {dimension_semantics = [#tpu.dimension_semantics<parallel>], iteration_bounds = array<i64: 1>, scalar_prefetch = 0 : i64, scratch_operands = 0 : i64, tpu.core_type = #tpu.core_type<tc>, window_params = [{transform_indices = @transform_0, window_bounds = array<i64: 8, 4>}, {pipeline_mode = #tpu.pipeline_mode<synchronous>, transform_indices = @transform_1, window_bounds = array<i64: 1, 16>}, {transform_indices = @transform_2, window_bounds = array<i64: 8, 128>}]} {
    %c0 = arith.constant 0 : index
    %c0_0 = arith.constant 0 : index
    %0 = vector.load %arg1[%c0, %c0_0] : memref<8x4xf32, #tpu.memory_space<vmem>>, vector<8x4xf32>
    %c0_1 = arith.constant 0 : index
    %c0_2 = arith.constant 0 : index
    %1 = vector.load %arg2[%c0_1, %c0_2] : memref<1x16xf32, #tpu.memory_space<vmem>>, vector<1x16xf32>
    %2 = vector.extract_strided_slice %0 {offsets = [0, 0], sizes = [8, 1], strides = [1, 1]} : vector<8x4xf32> to vector<8x1xf32>
    %3 = vector.broadcast %2 : vector<8x1xf32> to vector<8x16xf32>
    %4 = vector.broadcast %1 : vector<1x16xf32> to vector<8x16xf32>
    %5 = arith.mulf %3, %4 : vector<8x16xf32>
    %6 = math.sin %5 : vector<8x16xf32>
    %7 = math.cos %5 : vector<8x16xf32>
    %8 = vector.extract_strided_slice %0 {offsets = [0, 1], sizes = [8, 1], strides = [1, 1]} : vector<8x4xf32> to vector<8x1xf32>
    %9 = vector.broadcast %8 : vector<8x1xf32> to vector<8x16xf32>
    %10 = vector.broadcast %1 : vector<1x16xf32> to vector<8x16xf32>
    %11 = arith.mulf %9, %10 : vector<8x16xf32>
    %12 = math.sin %11 : vector<8x16xf32>
    %13 = math.cos %11 : vector<8x16xf32>
    %14 = vector.extract_strided_slice %0 {offsets = [0, 2], sizes = [8, 1], strides = [1, 1]} : vector<8x4xf32> to vector<8x1xf32>
    %15 = vector.broadcast %14 : vector<8x1xf32> to vector<8x16xf32>
    %16 = vector.broadcast %1 : vector<1x16xf32> to vector<8x16xf32>
    %17 = arith.mulf %15, %16 : vector<8x16xf32>
    %18 = math.sin %17 : vector<8x16xf32>
    %19 = math.cos %17 : vector<8x16xf32>
    %20 = vector.extract_strided_slice %0 {offsets = [0, 3], sizes = [8, 1], strides = [1, 1]} : vector<8x4xf32> to vector<8x1xf32>
    %21 = vector.broadcast %20 : vector<8x1xf32> to vector<8x16xf32>
    %22 = vector.broadcast %1 : vector<1x16xf32> to vector<8x16xf32>
    %23 = arith.mulf %21, %22 : vector<8x16xf32>
    %24 = math.sin %23 : vector<8x16xf32>
    %25 = math.cos %23 : vector<8x16xf32>
    %26 = tpu.concatenate %6, %7, %12, %13, %18, %19, %24, %25 in 1 : vector<8x16xf32>, vector<8x16xf32>, vector<8x16xf32>, vector<8x16xf32>, vector<8x16xf32>, vector<8x16xf32>, vector<8x16xf32>, vector<8x16xf32> -> vector<8x128xf32>
    %c0_3 = arith.constant 0 : index
    %c0_4 = arith.constant 0 : index
    %27 = vector.load %arg3[%c0_3, %c0_4] : memref<8x128xf32, #tpu.memory_space<vmem>>, vector<8x128xf32>
    tpu.vector_store %arg3[%c0_3, %c0_4], %26 {strides = array<i32>} : memref<8x128xf32, #tpu.memory_space<vmem>>, vector<8x128xf32>,
    return
  }
  func.func @transform_0(%arg0: i32) -> (i32, i32) {
    %c0_i32 = arith.constant 0 : i32
    %c0_i32_0 = arith.constant 0 : i32
    return %arg0, %c0_i32 : i32, i32
  }
  func.func @transform_1(%arg0: i32) -> (i32, i32) {
    %c0_i32 = arith.constant 0 : i32
    %c0_i32_0 = arith.constant 0 : i32
    %c0_i32_1 = arith.constant 0 : i32
    return %c0_i32, %c0_i32_0 : i32, i32
  }
  func.func @transform_2(%arg0: i32) -> (i32, i32) {
    %c0_i32 = arith.constant 0 : i32
    %c0_i32_0 = arith.constant 0 : i32
    return %arg0, %c0_i32 : i32, i32
  }
}

</mosaic_0001>

<llo_original>
// kernel: tpu_custom_call.1
$region0: #{tpu_custom_call.1}
  #allocation0 [shape = 'u32[]', space=smem, size = 0x4, offset = 0x4, fixed_abs, tag = 'smem constant byte address 0x4 - core index']
  #allocation1 [shape = 'u32[144,128]{1,0:T(1,128)}', space=vmem, size = 0x12000, scoped, tag = 'internal scratch']
  %s0 = inlined_call_operand.vmem [shape: f32[8,4], index: 0, kind: input, shape index: {}]
  %s1 = inlined_call_operand.vmem [shape: f32[1,16], index: 1, kind: input, shape index: {}]
  %s2 = inlined_call_operand.hbm [shape: f32[2,128], index: 2, kind: output, shape index: {}]
  %s3 = sld [smem:[#allocation0]]
  $region18: #{tpu_custom_call.1} parent=0
    _
  %s5 = ssub.s32 1, %s3
  %s6 = scalar_select 0, %s5, %s3
  $region1: #{tpu_custom_call.1} parent=0
    #allocation2 [shape = 'u8[4096]{0}', space=vmem, size = 0x1000, scoped, tag = 'output window, operand 0, single buffered']
    #allocation3 [shape = 's32[1]{0}', space=sflag, size = 0x4, scoped, tag = 'scoped memory for tpu_custom_call.1']
    %7 = vsyncpa [#allocation3], 0
    // Predicated region
    $region2: #{tpu_custom_call.1} parent=1 // pred_check
      _
    $region3: #{tpu_custom_call.1} parent=1 // pred_check_branch
      %9 = sbr.rel (0) target = $region5
    $region4: #{tpu_custom_call.1} parent=1 // pred_region
      _
    $region5: #{tpu_custom_call.1} parent=1 // pred_fallthru
      _
    // Predicated region
    $region6: #{tpu_custom_call.1} parent=1 // pred_check
      _
    $region7: #{tpu_custom_call.1} parent=1 // pred_check_branch
      %11 = sbr.rel (0) target = $region9
    $region8: #{tpu_custom_call.1} parent=1 // pred_region
      _
    $region9: #{tpu_custom_call.1} parent=1 // pred_fallthru
      _
    %v12 = vld [vmem:[%s0] sm:$0xff]
    %v13 = vld [vmem:[%s1] sm:$0x1]
    %15 = vset.pattern.permute.xlu0 0
    %16 = vperm.xlu0 %15, %v12
    %v17 = vpop.permute.xlu0 %16
    %v20 = vlaneseq
    %v21 = vshrl.u32 %v20, 7
    %v22 = vsub.s32 0, %v21
    %v23 = vrot.slane %v13, %v22
    %v25 = vmul.f32 %v17, %v23
    %v26 = vand.u32 2147483647, %v25
    %vm27 = vcmp.le.f32.partialorder %v26, 0.7853982
    %vm28 = vcmp.lt.s32.totalorder %v25, 0
    %v29 = vand.u32 %v25, 2139095040
    %v30 = vshrl.u32 %v29, 23
    %v31 = vsub.s32 %v30, 127
    %v32 = vand.u32 2147483647, %v25
    %v33 = vand.u32 %v32, 8388607
    %v34 = vor.u32 %v33, 8388608
    %v35 = vsub.s32 0, %v34
    %v36 = vadd.s32 %v31, 1
    %vm37 = vcmp.gt.s32.totalorder %v36, 0
    %v38 = vsel %vm37, %v36, 0
    %v39 = vshrl.u32 %v38, 5
    %v40 = vand.u32 %v38, 31
    %v41 = vsub.s32 32, %v40
    %v42 = vshrl.u32 683565275, %v41
    %v43 = vshll.u32 683565275, %v40
    %v44 = vshrl.u32 2475754826, %v41
    %v45 = vor.u32 %v43, %v44
    %v46 = vshll.u32 2475754826, %v40
    %v47 = vshrl.u32 2131351028, %v41
    %v48 = vor.u32 %v46, %v47
    %v49 = vshll.u32 2131351028, %v40
    %v50 = vshrl.u32 2102212464, %v41
    %v51 = vor.u32 %v49, %v50
    %v52 = vshll.u32 2102212464, %v40
    %v53 = vshrl.u32 920167782, %v41
    %v54 = vor.u32 %v52, %v53
    %v55 = vshll.u32 920167782, %v40
    %v56 = vshrl.u32 1326507024, %v41
    %v57 = vor.u32 %v55, %v56
    %vm58 = vcmp.lt.s32.totalorder %v39, 1
    %vm59 = vcmp.lt.s32.totalorder %v39, 2
    %vm60 = vcmp.lt.s32.totalorder %v39, 3
    %vm61 = vcmp.lt.s32.totalorder %v39, 4
    %v62 = vsel %vm58, %v42, %v45
    %v63 = vsel %vm61, %v51, 2102212464
    %v64 = vsel %vm60, %v48, %v63
    %v65 = vsel %vm59, %v62, %v64
    %v66 = vsel %vm58, %v45, %v48
    %v67 = vsel %vm61, %v54, 920167782
    %v68 = vsel %vm60, %v51, %v67
    %v69 = vsel %vm59, %v66, %v68
    %v70 = vsel %vm58, %v48, %v51
    %v71 = vsel %vm61, %v57, 1326507024
    %v72 = vsel %vm60, %v54, %v71
    %v73 = vsel %vm59, %v70, %v72
    %v74 = vshll.u32 %v34, 8
    %v75 = vmul.u32.u64.compose %v74, %v73
    %v76 = vextract.low.u32 %v75
    %v77 = vextract.high.u32 %v75
    %v78 = vmul.u32.u64.compose %v74, %v69
    %v79 = vextract.low.u32 %v78
    %v80 = vextract.high.u32 %v78
    %v81 = vmul.u32 %v74, %v65
    %v82 = vadd.s32 %v77, %v79
    %vm83 = vc.u32 %v77, %v79
    %v84 = vadd.s32 %v80, 1
    %v85 = vsel %vm83, %v84, %v80
    %v86 = vadd.s32 %v81, %v85
    %v87 = vadd.s32 %v86, 536870912
    %v88 = vshrl.u32 %v87, 30
    %v89 = vshll.u32 %v88, 30
    %v90 = vsub.s32 %v86, %v89
    %vm91 = vcmp.lt.s32.totalorder %v90, 0
    %v92 = vsub.s32 0, %v90
    %v93 = vsel %vm91, %v92, %v90
    %v94 = vclz %v93
    %v95 = vsub.s32 %v94, 2
    %vm96 = vcmp.gt.s32.totalorder 0, %v95
    %v97 = vsel %vm96, 0, %v95
    %v98 = vsub.s32 32, %v97
    %v99 = vshll.u32 %v90, %v97
    %v100 = vshrl.u32 %v82, %v98
    %v101 = vor.u32 %v99, %v100
    %v102 = vsub.s32 4294967266, %v97
    %v103 = vadd.s32 %v102, 127
    %v104 = vshll.u32 %v103, 23
    %v105 = vor.u32 4788187, %v104
    %v106 = vand.u32 2147483647, %v105
    %v108 = vcvt.s32.f32 %v101
    %v109 = vmul.f32 %v108, %v106
    %v110 = vxor.u32 %v109, 2147483648
    %v111 = vsel %vm28, %v110, %v109
    %v112 = vsub.s32 4, %v88
    %v113 = vsel %vm28, %v112, %v88
    %v114 = vsel %vm27, %v25, %v111
    %v115 = vsel %vm27, 0, %v113
    %v116 = vcosq.f32.pop %v114
    %v117 = vsinq.f32.pop %v114
    %vm118 = vweird.f32 %v25
    %v119 = vadd.s32 %v115, 3
    %v120 = vand.u32 %v119, 3
    %vm121 = vcmp.lt.s32.totalorder %v120, 2
    %vm122 = vcmp.eq.s32.totalorder %v120, 0
    %v123 = vxor.u32 %v117, 2147483648
    %v124 = vsel %vm122, %v116, %v123
    %vm125 = vcmp.eq.s32.totalorder %v120, 2
    %v126 = vxor.u32 %v116, 2147483648
    %v127 = vsel %vm125, %v126, %v117
    %v128 = vsel %vm121, %v124, %v127
    %v129 = vsel %vm118, nan, %v128
    %v130 = vand.u32 2147483647, %v25
    %vm131 = vcmp.le.f32.partialorder %v130, 0.7853982
    %vm132 = vcmp.lt.s32.totalorder %v25, 0
    %v133 = vand.u32 %v25, 2139095040
    %v134 = vshrl.u32 %v133, 23
    %v135 = vsub.s32 %v134, 127
    %v136 = vand.u32 2147483647, %v25
    %v137 = vand.u32 %v136, 8388607
    %v138 = vor.u32 %v137, 8388608
    %v139 = vsub.s32 0, %v138
    %v140 = vadd.s32 %v135, 1
    %vm141 = vcmp.gt.s32.totalorder %v140, 0
    %v142 = vsel %vm141, %v140, 0
    %v143 = vshrl.u32 %v142, 5
    %v144 = vand.u32 %v142, 31
    %v145 = vsub.s32 32, %v144
    %v146 = vshrl.u32 683565275, %v145
    %v147 = vshll.u32 683565275, %v144
    %v148 = vshrl.u32 2475754826, %v145
    %v149 = vor.u32 %v147, %v148
    %v150 = vshll.u32 2475754826, %v144
    %v151 = vshrl.u32 2131351028, %v145
    %v152 = vor.u32 %v150, %v151
    %v153 = vshll.u32 2131351028, %v144
    %v154 = vshrl.u32 2102212464, %v145
    %v155 = vor.u32 %v153, %v154
    %v156 = vshll.u32 2102212464, %v144
    %v157 = vshrl.u32 920167782, %v145
    %v158 = vor.u32 %v156, %v157
    %v159 = vshll.u32 920167782, %v144
    %v160 = vshrl.u32 1326507024, %v145
    %v161 = vor.u32 %v159, %v160
    %vm162 = vcmp.lt.s32.totalorder %v143, 1
    %vm163 = vcmp.lt.s32.totalorder %v143, 2
    %vm164 = vcmp.lt.s32.totalorder %v143, 3
    %vm165 = vcmp.lt.s32.totalorder %v143, 4
    %v166 = vsel %vm162, %v146, %v149
    %v167 = vsel %vm165, %v155, 2102212464
    %v168 = vsel %vm164, %v152, %v167
    %v169 = vsel %vm163, %v166, %v168
    %v170 = vsel %vm162, %v149, %v152
    %v171 = vsel %vm165, %v158, 920167782
    %v172 = vsel %vm164, %v155, %v171
    %v173 = vsel %vm163, %v170, %v172
    %v174 = vsel %vm162, %v152, %v155
    %v175 = vsel %vm165, %v161, 1326507024
    %v176 = vsel %vm164, %v158, %v175
    %v177 = vsel %vm163, %v174, %v176
    %v178 = vshll.u32 %v138, 8
    %v179 = vmul.u32.u64.compose %v178, %v177
    %v180 = vextract.low.u32 %v179
    %v181 = vextract.high.u32 %v179
    %v182 = vmul.u32.u64.compose %v178, %v173
    %v183 = vextract.low.u32 %v182
    %v184 = vextract.high.u32 %v182
    %v185 = vmul.u32 %v178, %v169
    %v186 = vadd.s32 %v181, %v183
    %vm187 = vc.u32 %v181, %v183
    %v188 = vadd.s32 %v184, 1
    %v189 = vsel %vm187, %v188, %v184
    %v190 = vadd.s32 %v185, %v189
    %v191 = vadd.s32 %v190, 536870912
    %v192 = vshrl.u32 %v191, 30
    %v193 = vshll.u32 %v192, 30
    %v194 = vsub.s32 %v190, %v193
    %vm195 = vcmp.lt.s32.totalorder %v194, 0
    %v196 = vsub.s32 0, %v194
    %v197 = vsel %vm195, %v196, %v194
    %v198 = vclz %v197
    %v199 = vsub.s32 %v198, 2
    %vm200 = vcmp.gt.s32.totalorder 0, %v199
    %v201 = vsel %vm200, 0, %v199
    %v202 = vsub.s32 32, %v201
    %v203 = vshll.u32 %v194, %v201
    %v204 = vshrl.u32 %v186, %v202
    %v205 = vor.u32 %v203, %v204
    %v206 = vsub.s32 4294967266, %v201
    %v207 = vadd.s32 %v206, 127
    %v208 = vshll.u32 %v207, 23
    %v209 = vor.u32 4788187, %v208
    %v210 = vand.u32 2147483647, %v209
    %v212 = vcvt.s32.f32 %v205
    %v213 = vmul.f32 %v212, %v210
    %v214 = vxor.u32 %v213, 2147483648
    %v215 = vsel %vm132, %v214, %v213
    %v216 = vsub.s32 4, %v192
    %v217 = vsel %vm132, %v216, %v192
    %v218 = vsel %vm131, %v25, %v215
    %v219 = vsel %vm131, 0, %v217
    %v220 = vcosq.f32.pop %v218
    %v221 = vsinq.f32.pop %v218
    %vm222 = vweird.f32 %v25
    %v223 = vand.u32 %v219, 3
    %vm224 = vcmp.lt.s32.totalorder %v223, 2
    %vm225 = vcmp.eq.s32.totalorder %v223, 0
    %v226 = vxor.u32 %v221, 2147483648
    %v227 = vsel %vm225, %v220, %v226
    %vm228 = vcmp.eq.s32.totalorder %v223, 2
    %v229 = vxor.u32 %v220, 2147483648
    %v230 = vsel %vm228, %v229, %v221
    %v231 = vsel %vm224, %v227, %v230
    %v232 = vsel %vm222, nan, %v231
    %233 = vset.pattern.permute.xlu0 1
    %234 = vperm.xlu0 %233, %v12
    %v235 = vpop.permute.xlu0 %234
    %v237 = vmul.f32 %v235, %v23
    %v238 = vand.u32 2147483647, %v237
    %vm239 = vcmp.le.f32.partialorder %v238, 0.7853982
    %vm240 = vcmp.lt.s32.totalorder %v237, 0
    %v241 = vand.u32 %v237, 2139095040
    %v242 = vshrl.u32 %v241, 23
    %v243 = vsub.s32 %v242, 127
    %v244 = vand.u32 2147483647, %v237
    %v245 = vand.u32 %v244, 8388607
    %v246 = vor.u32 %v245, 8388608
    %v247 = vsub.s32 0, %v246
    %v248 = vadd.s32 %v243, 1
    %vm249 = vcmp.gt.s32.totalorder %v248, 0
    %v250 = vsel %vm249, %v248, 0
    %v251 = vshrl.u32 %v250, 5
    %v252 = vand.u32 %v250, 31
    %v253 = vsub.s32 32, %v252
    %v254 = vshrl.u32 683565275, %v253
    %v255 = vshll.u32 683565275, %v252
    %v256 = vshrl.u32 2475754826, %v253
    %v257 = vor.u32 %v255, %v256
    %v258 = vshll.u32 2475754826, %v252
    %v259 = vshrl.u32 2131351028, %v253
    %v260 = vor.u32 %v258, %v259
    %v261 = vshll.u32 2131351028, %v252
    %v262 = vshrl.u32 2102212464, %v253
    %v263 = vor.u32 %v261, %v262
    %v264 = vshll.u32 2102212464, %v252
    %v265 = vshrl.u32 920167782, %v253
    %v266 = vor.u32 %v264, %v265
    %v267 = vshll.u32 920167782, %v252
    %v268 = vshrl.u32 1326507024, %v253
    %v269 = vor.u32 %v267, %v268
    %vm270 = vcmp.lt.s32.totalorder %v251, 1
    %vm271 = vcmp.lt.s32.totalorder %v251, 2
    %vm272 = vcmp.lt.s32.totalorder %v251, 3
    %vm273 = vcmp.lt.s32.totalorder %v251, 4
    %v274 = vsel %vm270, %v254, %v257
    %v275 = vsel %vm273, %v263, 2102212464
    %v276 = vsel %vm272, %v260, %v275
    %v277 = vsel %vm271, %v274, %v276
    %v278 = vsel %vm270, %v257, %v260
    %v279 = vsel %vm273, %v266, 920167782
    %v280 = vsel %vm272, %v263, %v279
    %v281 = vsel %vm271, %v278, %v280
    %v282 = vsel %vm270, %v260, %v263
    %v283 = vsel %vm273, %v269, 1326507024
    %v284 = vsel %vm272, %v266, %v283
    %v285 = vsel %vm271, %v282, %v284
    %v286 = vshll.u32 %v246, 8
    %v287 = vmul.u32.u64.compose %v286, %v285
    %v288 = vextract.low.u32 %v287
    %v289 = vextract.high.u32 %v287
    %v290 = vmul.u32.u64.compose %v286, %v281
    %v291 = vextract.low.u32 %v290
    %v292 = vextract.high.u32 %v290
    %v293 = vmul.u32 %v286, %v277
    %v294 = vadd.s32 %v289, %v291
    %vm295 = vc.u32 %v289, %v291
    %v296 = vadd.s32 %v292, 1
    %v297 = vsel %vm295, %v296, %v292
    %v298 = vadd.s32 %v293, %v297
    %v299 = vadd.s32 %v298, 536870912
    %v300 = vshrl.u32 %v299, 30
    %v301 = vshll.u32 %v300, 30
    %v302 = vsub.s32 %v298, %v301
    %vm303 = vcmp.lt.s32.totalorder %v302, 0
    %v304 = vsub.s32 0, %v302
    %v305 = vsel %vm303, %v304, %v302
    %v306 = vclz %v305
    %v307 = vsub.s32 %v306, 2
    %vm308 = vcmp.gt.s32.totalorder 0, %v307
    %v309 = vsel %vm308, 0, %v307
    %v310 = vsub.s32 32, %v309
    %v311 = vshll.u32 %v302, %v309
    %v312 = vshrl.u32 %v294, %v310
    %v313 = vor.u32 %v311, %v312
    %v314 = vsub.s32 4294967266, %v309
    %v315 = vadd.s32 %v314, 127
    %v316 = vshll.u32 %v315, 23
    %v317 = vor.u32 4788187, %v316
    %v318 = vand.u32 2147483647, %v317
    %v320 = vcvt.s32.f32 %v313
    %v321 = vmul.f32 %v320, %v318
    %v322 = vxor.u32 %v321, 2147483648
    %v323 = vsel %vm240, %v322, %v321
    %v324 = vsub.s32 4, %v300
    %v325 = vsel %vm240, %v324, %v300
    %v326 = vsel %vm239, %v237, %v323
    %v327 = vsel %vm239, 0, %v325
    %v328 = vcosq.f32.pop %v326
    %v329 = vsinq.f32.pop %v326
    %vm330 = vweird.f32 %v237
    %v331 = vadd.s32 %v327, 3
    %v332 = vand.u32 %v331, 3
    %vm333 = vcmp.lt.s32.totalorder %v332, 2
    %vm334 = vcmp.eq.s32.totalorder %v332, 0
    %v335 = vxor.u32 %v329, 2147483648
    %v336 = vsel %vm334, %v328, %v335
    %vm337 = vcmp.eq.s32.totalorder %v332, 2
    %v338 = vxor.u32 %v328, 2147483648
    %v339 = vsel %vm337, %v338, %v329
    %v340 = vsel %vm333, %v336, %v339
    %v341 = vsel %vm330, nan, %v340
    %v342 = vand.u32 2147483647, %v237
    %vm343 = vcmp.le.f32.partialorder %v342, 0.7853982
    %vm344 = vcmp.lt.s32.totalorder %v237, 0
    %v345 = vand.u32 %v237, 2139095040
    %v346 = vshrl.u32 %v345, 23
    %v347 = vsub.s32 %v346, 127
    %v348 = vand.u32 2147483647, %v237
    %v349 = vand.u32 %v348, 8388607
    %v350 = vor.u32 %v349, 8388608
    %v351 = vsub.s32 0, %v350
    %v352 = vadd.s32 %v347, 1
    %vm353 = vcmp.gt.s32.totalorder %v352, 0
    %v354 = vsel %vm353, %v352, 0
    %v355 = vshrl.u32 %v354, 5
    %v356 = vand.u32 %v354, 31
    %v357 = vsub.s32 32, %v356
    %v358 = vshrl.u32 683565275, %v357
    %v359 = vshll.u32 683565275, %v356
    %v360 = vshrl.u32 2475754826, %v357
    %v361 = vor.u32 %v359, %v360
    %v362 = vshll.u32 2475754826, %v356
    %v363 = vshrl.u32 2131351028, %v357
    %v364 = vor.u32 %v362, %v363
    %v365 = vshll.u32 2131351028, %v356
    %v366 = vshrl.u32 2102212464, %v357
    %v367 = vor.u32 %v365, %v366
    %v368 = vshll.u32 2102212464, %v356
    %v369 = vshrl.u32 920167782, %v357
    %v370 = vor.u32 %v368, %v369
    %v371 = vshll.u32 920167782, %v356
    %v372 = vshrl.u32 1326507024, %v357
    %v373 = vor.u32 %v371, %v372
    %vm374 = vcmp.lt.s32.totalorder %v355, 1
    %vm375 = vcmp.lt.s32.totalorder %v355, 2
    %vm376 = vcmp.lt.s32.totalorder %v355, 3
    %vm377 = vcmp.lt.s32.totalorder %v355, 4
    %v378 = vsel %vm374, %v358, %v361
    %v379 = vsel %vm377, %v367, 2102212464
    %v380 = vsel %vm376, %v364, %v379
    %v381 = vsel %vm375, %v378, %v380
    %v382 = vsel %vm374, %v361, %v364
    %v383 = vsel %vm377, %v370, 920167782
    %v384 = vsel %vm376, %v367, %v383
    %v385 = vsel %vm375, %v382, %v384
    %v386 = vsel %vm374, %v364, %v367
    %v387 = vsel %vm377, %v373, 1326507024
    %v388 = vsel %vm376, %v370, %v387
    %v389 = vsel %vm375, %v386, %v388
    %v390 = vshll.u32 %v350, 8
    %v391 = vmul.u32.u64.compose %v390, %v389
    %v392 = vextract.low.u32 %v391
    %v393 = vextract.high.u32 %v391
    %v394 = vmul.u32.u64.compose %v390, %v385
    %v395 = vextract.low.u32 %v394
    %v396 = vextract.high.u32 %v394
    %v397 = vmul.u32 %v390, %v381
    %v398 = vadd.s32 %v393, %v395
    %vm399 = vc.u32 %v393, %v395
    %v400 = vadd.s32 %v396, 1
    %v401 = vsel %vm399, %v400, %v396
    %v402 = vadd.s32 %v397, %v401
    %v403 = vadd.s32 %v402, 536870912
    %v404 = vshrl.u32 %v403, 30
    %v405 = vshll.u32 %v404, 30
    %v406 = vsub.s32 %v402, %v405
    %vm407 = vcmp.lt.s32.totalorder %v406, 0
    %v408 = vsub.s32 0, %v406
    %v409 = vsel %vm407, %v408, %v406
    %v410 = vclz %v409
    %v411 = vsub.s32 %v410, 2
    %vm412 = vcmp.gt.s32.totalorder 0, %v411
    %v413 = vsel %vm412, 0, %v411
    %v414 = vsub.s32 32, %v413
    %v415 = vshll.u32 %v406, %v413
    %v416 = vshrl.u32 %v398, %v414
    %v417 = vor.u32 %v415, %v416
    %v418 = vsub.s32 4294967266, %v413
    %v419 = vadd.s32 %v418, 127
    %v420 = vshll.u32 %v419, 23
    %v421 = vor.u32 4788187, %v420
    %v422 = vand.u32 2147483647, %v421
    %v424 = vcvt.s32.f32 %v417
    %v425 = vmul.f32 %v424, %v422
    %v426 = vxor.u32 %v425, 2147483648
    %v427 = vsel %vm344, %v426, %v425
    %v428 = vsub.s32 4, %v404
    %v429 = vsel %vm344, %v428, %v404
    %v430 = vsel %vm343, %v237, %v427
    %v431 = vsel %vm343, 0, %v429
    %v432 = vcosq.f32.pop %v430
    %v433 = vsinq.f32.pop %v430
    %vm434 = vweird.f32 %v237
    %v435 = vand.u32 %v431, 3
    %vm436 = vcmp.lt.s32.totalorder %v435, 2
    %vm437 = vcmp.eq.s32.totalorder %v435, 0
    %v438 = vxor.u32 %v433, 2147483648
    %v439 = vsel %vm437, %v432, %v438
    %vm440 = vcmp.eq.s32.totalorder %v435, 2
    %v441 = vxor.u32 %v432, 2147483648
    %v442 = vsel %vm440, %v441, %v433
    %v443 = vsel %vm436, %v439, %v442
    %v444 = vsel %vm434, nan, %v443
    %445 = vset.pattern.permute.xlu0 2
    %446 = vperm.xlu0 %445, %v12
    %v447 = vpop.permute.xlu0 %446
    %v449 = vmul.f32 %v447, %v23
    %v450 = vand.u32 2147483647, %v449
    %vm451 = vcmp.le.f32.partialorder %v450, 0.7853982
    %vm452 = vcmp.lt.s32.totalorder %v449, 0
    %v453 = vand.u32 %v449, 2139095040
    %v454 = vshrl.u32 %v453, 23
    %v455 = vsub.s32 %v454, 127
    %v456 = vand.u32 2147483647, %v449
    %v457 = vand.u32 %v456, 8388607
    %v458 = vor.u32 %v457, 8388608
    %v459 = vsub.s32 0, %v458
    %v460 = vadd.s32 %v455, 1
    %vm461 = vcmp.gt.s32.totalorder %v460, 0
    %v462 = vsel %vm461, %v460, 0
    %v463 = vshrl.u32 %v462, 5
    %v464 = vand.u32 %v462, 31
    %v465 = vsub.s32 32, %v464
    %v466 = vshrl.u32 683565275, %v465
    %v467 = vshll.u32 683565275, %v464
    %v468 = vshrl.u32 2475754826, %v465
    %v469 = vor.u32 %v467, %v468
    %v470 = vshll.u32 2475754826, %v464
    %v471 = vshrl.u32 2131351028, %v465
    %v472 = vor.u32 %v470, %v471
    %v473 = vshll.u32 2131351028, %v464
    %v474 = vshrl.u32 2102212464, %v465
    %v475 = vor.u32 %v473, %v474
    %v476 = vshll.u32 2102212464, %v464
    %v477 = vshrl.u32 920167782, %v465
    %v478 = vor.u32 %v476, %v477
    %v479 = vshll.u32 920167782, %v464
    %v480 = vshrl.u32 1326507024, %v465
    %v481 = vor.u32 %v479, %v480
    %vm482 = vcmp.lt.s32.totalorder %v463, 1
    %vm483 = vcmp.lt.s32.totalorder %v463, 2
    %vm484 = vcmp.lt.s32.totalorder %v463, 3
    %vm485 = vcmp.lt.s32.totalorder %v463, 4
    %v486 = vsel %vm482, %v466, %v469
    %v487 = vsel %vm485, %v475, 2102212464
    %v488 = vsel %vm484, %v472, %v487
    %v489 = vsel %vm483, %v486, %v488
    %v490 = vsel %vm482, %v469, %v472
    %v491 = vsel %vm485, %v478, 920167782
    %v492 = vsel %vm484, %v475, %v491
    %v493 = vsel %vm483, %v490, %v492
    %v494 = vsel %vm482, %v472, %v475
    %v495 = vsel %vm485, %v481, 1326507024
    %v496 = vsel %vm484, %v478, %v495
    %v497 = vsel %vm483, %v494, %v496
    %v498 = vshll.u32 %v458, 8
    %v499 = vmul.u32.u64.compose %v498, %v497
    %v500 = vextract.low.u32 %v499
    %v501 = vextract.high.u32 %v499
    %v502 = vmul.u32.u64.compose %v498, %v493
    %v503 = vextract.low.u32 %v502
    %v504 = vextract.high.u32 %v502
    %v505 = vmul.u32 %v498, %v489
    %v506 = vadd.s32 %v501, %v503
    %vm507 = vc.u32 %v501, %v503
    %v508 = vadd.s32 %v504, 1
    %v509 = vsel %vm507, %v508, %v504
    %v510 = vadd.s32 %v505, %v509
    %v511 = vadd.s32 %v510, 536870912
    %v512 = vshrl.u32 %v511, 30
    %v513 = vshll.u32 %v512, 30
    %v514 = vsub.s32 %v510, %v513
    %vm515 = vcmp.lt.s32.totalorder %v514, 0
    %v516 = vsub.s32 0, %v514
    %v517 = vsel %vm515, %v516, %v514
    %v518 = vclz %v517
    %v519 = vsub.s32 %v518, 2
    %vm520 = vcmp.gt.s32.totalorder 0, %v519
    %v521 = vsel %vm520, 0, %v519
    %v522 = vsub.s32 32, %v521
    %v523 = vshll.u32 %v514, %v521
    %v524 = vshrl.u32 %v506, %v522
    %v525 = vor.u32 %v523, %v524
    %v526 = vsub.s32 4294967266, %v521
    %v527 = vadd.s32 %v526, 127
    %v528 = vshll.u32 %v527, 23
    %v529 = vor.u32 4788187, %v528
    %v530 = vand.u32 2147483647, %v529
    %v532 = vcvt.s32.f32 %v525
    %v533 = vmul.f32 %v532, %v530
    %v534 = vxor.u32 %v533, 2147483648
    %v535 = vsel %vm452, %v534, %v533
    %v536 = vsub.s32 4, %v512
    %v537 = vsel %vm452, %v536, %v512
    %v538 = vsel %vm451, %v449, %v535
    %v539 = vsel %vm451, 0, %v537
    %v540 = vcosq.f32.pop %v538
    %v541 = vsinq.f32.pop %v538
    %vm542 = vweird.f32 %v449
    %v543 = vadd.s32 %v539, 3
    %v544 = vand.u32 %v543, 3
    %vm545 = vcmp.lt.s32.totalorder %v544, 2
    %vm546 = vcmp.eq.s32.totalorder %v544, 0
    %v547 = vxor.u32 %v541, 2147483648
    %v548 = vsel %vm546, %v540, %v547
    %vm549 = vcmp.eq.s32.totalorder %v544, 2
    %v550 = vxor.u32 %v540, 2147483648
    %v551 = vsel %vm549, %v550, %v541
    %v552 = vsel %vm545, %v548, %v551
    %v553 = vsel %vm542, nan, %v552
    %v554 = vand.u32 2147483647, %v449
    %vm555 = vcmp.le.f32.partialorder %v554, 0.7853982
    %vm556 = vcmp.lt.s32.totalorder %v449, 0
    %v557 = vand.u32 %v449, 2139095040
    %v558 = vshrl.u32 %v557, 23
    %v559 = vsub.s32 %v558, 127
    %v560 = vand.u32 2147483647, %v449
    %v561 = vand.u32 %v560, 8388607
    %v562 = vor.u32 %v561, 8388608
    %v563 = vsub.s32 0, %v562
    %v564 = vadd.s32 %v559, 1
    %vm565 = vcmp.gt.s32.totalorder %v564, 0
    %v566 = vsel %vm565, %v564, 0
    %v567 = vshrl.u32 %v566, 5
    %v568 = vand.u32 %v566, 31
    %v569 = vsub.s32 32, %v568
    %v570 = vshrl.u32 683565275, %v569
    %v571 = vshll.u32 683565275, %v568
    %v572 = vshrl.u32 2475754826, %v569
    %v573 = vor.u32 %v571, %v572
    %v574 = vshll.u32 2475754826, %v568
    %v575 = vshrl.u32 2131351028, %v569
    %v576 = vor.u32 %v574, %v575
    %v577 = vshll.u32 2131351028, %v568
    %v578 = vshrl.u32 2102212464, %v569
    %v579 = vor.u32 %v577, %v578
    %v580 = vshll.u32 2102212464, %v568
    %v581 = vshrl.u32 920167782, %v569
    %v582 = vor.u32 %v580, %v581
    %v583 = vshll.u32 920167782, %v568
    %v584 = vshrl.u32 1326507024, %v569
    %v585 = vor.u32 %v583, %v584
    %vm586 = vcmp.lt.s32.totalorder %v567, 1
    %vm587 = vcmp.lt.s32.totalorder %v567, 2
    %vm588 = vcmp.lt.s32.totalorder %v567, 3
    %vm589 = vcmp.lt.s32.totalorder %v567, 4
    %v590 = vsel %vm586, %v570, %v573
    %v591 = vsel %vm589, %v579, 2102212464
    %v592 = vsel %vm588, %v576, %v591
    %v593 = vsel %vm587, %v590, %v592
    %v594 = vsel %vm586, %v573, %v576
    %v595 = vsel %vm589, %v582, 920167782
    %v596 = vsel %vm588, %v579, %v595
    %v597 = vsel %vm587, %v594, %v596
    %v598 = vsel %vm586, %v576, %v579
    %v599 = vsel %vm589, %v585, 1326507024
    %v600 = vsel %vm588, %v582, %v599
    %v601 = vsel %vm587, %v598, %v600
    %v602 = vshll.u32 %v562, 8
    %v603 = vmul.u32.u64.compose %v602, %v601
    %v604 = vextract.low.u32 %v603
    %v605 = vextract.high.u32 %v603
    %v606 = vmul.u32.u64.compose %v602, %v597
    %v607 = vextract.low.u32 %v606
    %v608 = vextract.high.u32 %v606
    %v609 = vmul.u32 %v602, %v593
    %v610 = vadd.s32 %v605, %v607
    %vm611 = vc.u32 %v605, %v607
    %v612 = vadd.s32 %v608, 1
    %v613 = vsel %vm611, %v612, %v608
    %v614 = vadd.s32 %v609, %v613
    %v615 = vadd.s32 %v614, 536870912
    %v616 = vshrl.u32 %v615, 30
    %v617 = vshll.u32 %v616, 30
    %v618 = vsub.s32 %v614, %v617
    %vm619 = vcmp.lt.s32.totalorder %v618, 0
    %v620 = vsub.s32 0, %v618
    %v621 = vsel %vm619, %v620, %v618
    %v622 = vclz %v621
    %v623 = vsub.s32 %v622, 2
    %vm624 = vcmp.gt.s32.totalorder 0, %v623
    %v625 = vsel %vm624, 0, %v623
    %v626 = vsub.s32 32, %v625
    %v627 = vshll.u32 %v618, %v625
    %v628 = vshrl.u32 %v610, %v626
    %v629 = vor.u32 %v627, %v628
    %v630 = vsub.s32 4294967266, %v625
    %v631 = vadd.s32 %v630, 127
    %v632 = vshll.u32 %v631, 23
    %v633 = vor.u32 4788187, %v632
    %v634 = vand.u32 2147483647, %v633
    %v636 = vcvt.s32.f32 %v629
    %v637 = vmul.f32 %v636, %v634
    %v638 = vxor.u32 %v637, 2147483648
    %v639 = vsel %vm556, %v638, %v637
    %v640 = vsub.s32 4, %v616
    %v641 = vsel %vm556, %v640, %v616
    %v642 = vsel %vm555, %v449, %v639
    %v643 = vsel %vm555, 0, %v641
    %v644 = vcosq.f32.pop %v642
    %v645 = vsinq.f32.pop %v642
    %vm646 = vweird.f32 %v449
    %v647 = vand.u32 %v643, 3
    %vm648 = vcmp.lt.s32.totalorder %v647, 2
    %vm649 = vcmp.eq.s32.totalorder %v647, 0
    %v650 = vxor.u32 %v645, 2147483648
    %v651 = vsel %vm649, %v644, %v650
    %vm652 = vcmp.eq.s32.totalorder %v647, 2
    %v653 = vxor.u32 %v644, 2147483648
    %v654 = vsel %vm652, %v653, %v645
    %v655 = vsel %vm648, %v651, %v654
    %v656 = vsel %vm646, nan, %v655
    %657 = vset.pattern.permute.xlu0 3
    %658 = vperm.xlu0 %657, %v12
    %v659 = vpop.permute.xlu0 %658
    %v661 = vmul.f32 %v659, %v23
    %v662 = vand.u32 2147483647, %v661
    %vm663 = vcmp.le.f32.partialorder %v662, 0.7853982
    %vm664 = vcmp.lt.s32.totalorder %v661, 0
    %v665 = vand.u32 %v661, 2139095040
    %v666 = vshrl.u32 %v665, 23
    %v667 = vsub.s32 %v666, 127
    %v668 = vand.u32 2147483647, %v661
    %v669 = vand.u32 %v668, 8388607
    %v670 = vor.u32 %v669, 8388608
    %v671 = vsub.s32 0, %v670
    %v672 = vadd.s32 %v667, 1
    %vm673 = vcmp.gt.s32.totalorder %v672, 0
    %v674 = vsel %vm673, %v672, 0
    %v675 = vshrl.u32 %v674, 5
    %v676 = vand.u32 %v674, 31
    %v677 = vsub.s32 32, %v676
    %v678 = vshrl.u32 683565275, %v677
    %v679 = vshll.u32 683565275, %v676
    %v680 = vshrl.u32 2475754826, %v677
    %v681 = vor.u32 %v679, %v680
    %v682 = vshll.u32 2475754826, %v676
    %v683 = vshrl.u32 2131351028, %v677
    %v684 = vor.u32 %v682, %v683
    %v685 = vshll.u32 2131351028, %v676
    %v686 = vshrl.u32 2102212464, %v677
    %v687 = vor.u32 %v685, %v686
    %v688 = vshll.u32 2102212464, %v676
    %v689 = vshrl.u32 920167782, %v677
    %v690 = vor.u32 %v688, %v689
    %v691 = vshll.u32 920167782, %v676
    %v692 = vshrl.u32 1326507024, %v677
    %v693 = vor.u32 %v691, %v692
    %vm694 = vcmp.lt.s32.totalorder %v675, 1
    %vm695 = vcmp.lt.s32.totalorder %v675, 2
    %vm696 = vcmp.lt.s32.totalorder %v675, 3
    %vm697 = vcmp.lt.s32.totalorder %v675, 4
    %v698 = vsel %vm694, %v678, %v681
    %v699 = vsel %vm697, %v687, 2102212464
    %v700 = vsel %vm696, %v684, %v699
    %v701 = vsel %vm695, %v698, %v700
    %v702 = vsel %vm694, %v681, %v684
    %v703 = vsel %vm697, %v690, 920167782
    %v704 = vsel %vm696, %v687, %v703
    %v705 = vsel %vm695, %v702, %v704
    %v706 = vsel %vm694, %v684, %v687
    %v707 = vsel %vm697, %v693, 1326507024
    %v708 = vsel %vm696, %v690, %v707
    %v709 = vsel %vm695, %v706, %v708
    %v710 = vshll.u32 %v670, 8
    %v711 = vmul.u32.u64.compose %v710, %v709
    %v712 = vextract.low.u32 %v711
    %v713 = vextract.high.u32 %v711
    %v714 = vmul.u32.u64.compose %v710, %v705
    %v715 = vextract.low.u32 %v714
    %v716 = vextract.high.u32 %v714
    %v717 = vmul.u32 %v710, %v701
    %v718 = vadd.s32 %v713, %v715
    %vm719 = vc.u32 %v713, %v715
    %v720 = vadd.s32 %v716, 1
    %v721 = vsel %vm719, %v720, %v716
    %v722 = vadd.s32 %v717, %v721
    %v723 = vadd.s32 %v722, 536870912
    %v724 = vshrl.u32 %v723, 30
    %v725 = vshll.u32 %v724, 30
    %v726 = vsub.s32 %v722, %v725
    %vm727 = vcmp.lt.s32.totalorder %v726, 0
    %v728 = vsub.s32 0, %v726
    %v729 = vsel %vm727, %v728, %v726
    %v730 = vclz %v729
    %v731 = vsub.s32 %v730, 2
    %vm732 = vcmp.gt.s32.totalorder 0, %v731
    %v733 = vsel %vm732, 0, %v731
    %v734 = vsub.s32 32, %v733
    %v735 = vshll.u32 %v726, %v733
    %v736 = vshrl.u32 %v718, %v734
    %v737 = vor.u32 %v735, %v736
    %v738 = vsub.s32 4294967266, %v733
    %v739 = vadd.s32 %v738, 127
    %v740 = vshll.u32 %v739, 23
    %v741 = vor.u32 4788187, %v740
    %v742 = vand.u32 2147483647, %v741
    %v744 = vcvt.s32.f32 %v737
    %v745 = vmul.f32 %v744, %v742
    %v746 = vxor.u32 %v745, 2147483648
    %v747 = vsel %vm664, %v746, %v745
    %v748 = vsub.s32 4, %v724
    %v749 = vsel %vm664, %v748, %v724
    %v750 = vsel %vm663, %v661, %v747
    %v751 = vsel %vm663, 0, %v749
    %v752 = vcosq.f32.pop %v750
    %v753 = vsinq.f32.pop %v750
    %vm754 = vweird.f32 %v661
    %v755 = vadd.s32 %v751, 3
    %v756 = vand.u32 %v755, 3
    %vm757 = vcmp.lt.s32.totalorder %v756, 2
    %vm758 = vcmp.eq.s32.totalorder %v756, 0
    %v759 = vxor.u32 %v753, 2147483648
    %v760 = vsel %vm758, %v752, %v759
    %vm761 = vcmp.eq.s32.totalorder %v756, 2
    %v762 = vxor.u32 %v752, 2147483648
    %v763 = vsel %vm761, %v762, %v753
    %v764 = vsel %vm757, %v760, %v763
    %v765 = vsel %vm754, nan, %v764
    %v766 = vand.u32 2147483647, %v661
    %vm767 = vcmp.le.f32.partialorder %v766, 0.7853982
    %vm768 = vcmp.lt.s32.totalorder %v661, 0
    %v769 = vand.u32 %v661, 2139095040
    %v770 = vshrl.u32 %v769, 23
    %v771 = vsub.s32 %v770, 127
    %v772 = vand.u32 2147483647, %v661
    %v773 = vand.u32 %v772, 8388607
    %v774 = vor.u32 %v773, 8388608
    %v775 = vsub.s32 0, %v774
    %v776 = vadd.s32 %v771, 1
    %vm777 = vcmp.gt.s32.totalorder %v776, 0
    %v778 = vsel %vm777, %v776, 0
    %v779 = vshrl.u32 %v778, 5
    %v780 = vand.u32 %v778, 31
    %v781 = vsub.s32 32, %v780
    %v782 = vshrl.u32 683565275, %v781
    %v783 = vshll.u32 683565275, %v780
    %v784 = vshrl.u32 2475754826, %v781
    %v785 = vor.u32 %v783, %v784
    %v786 = vshll.u32 2475754826, %v780
    %v787 = vshrl.u32 2131351028, %v781
    %v788 = vor.u32 %v786, %v787
    %v789 = vshll.u32 2131351028, %v780
    %v790 = vshrl.u32 2102212464, %v781
    %v791 = vor.u32 %v789, %v790
    %v792 = vshll.u32 2102212464, %v780
    %v793 = vshrl.u32 920167782, %v781
    %v794 = vor.u32 %v792, %v793
    %v795 = vshll.u32 920167782, %v780
    %v796 = vshrl.u32 1326507024, %v781
    %v797 = vor.u32 %v795, %v796
    %vm798 = vcmp.lt.s32.totalorder %v779, 1
    %vm799 = vcmp.lt.s32.totalorder %v779, 2
    %vm800 = vcmp.lt.s32.totalorder %v779, 3
    %vm801 = vcmp.lt.s32.totalorder %v779, 4
    %v802 = vsel %vm798, %v782, %v785
    %v803 = vsel %vm801, %v791, 2102212464
    %v804 = vsel %vm800, %v788, %v803
    %v805 = vsel %vm799, %v802, %v804
    %v806 = vsel %vm798, %v785, %v788
    %v807 = vsel %vm801, %v794, 920167782
    %v808 = vsel %vm800, %v791, %v807
    %v809 = vsel %vm799, %v806, %v808
    %v810 = vsel %vm798, %v788, %v791
    %v811 = vsel %vm801, %v797, 1326507024
    %v812 = vsel %vm800, %v794, %v811
    %v813 = vsel %vm799, %v810, %v812
    %v814 = vshll.u32 %v774, 8
    %v815 = vmul.u32.u64.compose %v814, %v813
    %v816 = vextract.low.u32 %v815
    %v817 = vextract.high.u32 %v815
    %v818 = vmul.u32.u64.compose %v814, %v809
    %v819 = vextract.low.u32 %v818
    %v820 = vextract.high.u32 %v818
    %v821 = vmul.u32 %v814, %v805
    %v822 = vadd.s32 %v817, %v819
    %vm823 = vc.u32 %v817, %v819
    %v824 = vadd.s32 %v820, 1
    %v825 = vsel %vm823, %v824, %v820
    %v826 = vadd.s32 %v821, %v825
    %v827 = vadd.s32 %v826, 536870912
    %v828 = vshrl.u32 %v827, 30
    %v829 = vshll.u32 %v828, 30
    %v830 = vsub.s32 %v826, %v829
    %vm831 = vcmp.lt.s32.totalorder %v830, 0
    %v832 = vsub.s32 0, %v830
    %v833 = vsel %vm831, %v832, %v830
    %v834 = vclz %v833
    %v835 = vsub.s32 %v834, 2
    %vm836 = vcmp.gt.s32.totalorder 0, %v835
    %v837 = vsel %vm836, 0, %v835
    %v838 = vsub.s32 32, %v837
    %v839 = vshll.u32 %v830, %v837
    %v840 = vshrl.u32 %v822, %v838
    %v841 = vor.u32 %v839, %v840
    %v842 = vsub.s32 4294967266, %v837
    %v843 = vadd.s32 %v842, 127
    %v844 = vshll.u32 %v843, 23
    %v845 = vor.u32 4788187, %v844
    %v846 = vand.u32 2147483647, %v845
    %v848 = vcvt.s32.f32 %v841
    %v849 = vmul.f32 %v848, %v846
    %v850 = vxor.u32 %v849, 2147483648
    %v851 = vsel %vm768, %v850, %v849
    %v852 = vsub.s32 4, %v828
    %v853 = vsel %vm768, %v852, %v828
    %v854 = vsel %vm767, %v661, %v851
    %v855 = vsel %vm767, 0, %v853
    %v856 = vcosq.f32.pop %v854
    %v857 = vsinq.f32.pop %v854
    %vm858 = vweird.f32 %v661
    %v859 = vand.u32 %v855, 3
    %vm860 = vcmp.lt.s32.totalorder %v859, 2
    %vm861 = vcmp.eq.s32.totalorder %v859, 0
    %v862 = vxor.u32 %v857, 2147483648
    %v863 = vsel %vm861, %v856, %v862
    %vm864 = vcmp.eq.s32.totalorder %v859, 2
    %v865 = vxor.u32 %v856, 2147483648
    %v866 = vsel %vm864, %v865, %v857
    %v867 = vsel %vm860, %v863, %v866
    %v868 = vsel %vm858, nan, %v867
    %870 = vrot.lane.b32.xlu0 %v232, 16
    %v871 = vpop.permute.xlu0 %870
    %874 = vrot.lane.b32.xlu0 %v341, 32
    %v875 = vpop.permute.xlu0 %874
    %878 = vrot.lane.b32.xlu0 %v444, 48
    %v879 = vpop.permute.xlu0 %878
    %882 = vrot.lane.b32.xlu0 %v553, 64
    %v883 = vpop.permute.xlu0 %882
    %886 = vrot.lane.b32.xlu0 %v656, 80
    %v887 = vpop.permute.xlu0 %886
    %890 = vrot.lane.b32.xlu0 %v765, 96
    %v891 = vpop.permute.xlu0 %890
    %894 = vrot.lane.b32.xlu0 %v868, 112
    %v895 = vpop.permute.xlu0 %894
    %vm897 = vcmask 130048
    %v898 = vsel %vm897, %v129, %v871
    %vm899 = vcmask 261120
    %v900 = vsel %vm899, %v898, %v875
    %vm901 = vcmask 392192
    %v902 = vsel %vm901, %v900, %v879
    %vm903 = vcmask 523264
    %v904 = vsel %vm903, %v902, %v883
    %vm905 = vcmask 654336
    %v906 = vsel %vm905, %v904, %v887
    %vm907 = vcmask 785408
    %v908 = vsel %vm907, %v906, %v891
    %vm909 = vcmask 916480
    %v910 = vsel %vm909, %v908, %v895
    %911 = vst [vmem:[#allocation2] sm:$0xff] %v910
    // Predicated region
    $region10: #{tpu_custom_call.1} parent=1 // pred_check
      _
    $region11: #{tpu_custom_call.1} parent=1 // pred_check_branch
      %913 = sbr.rel (0) target = $region13
    $region12: #{tpu_custom_call.1} parent=1 // pred_region
      %s915 = ssub.s32 128, 32
      %916 = vsyncadd [#allocation3], %s915
      %s917 = sshll.u32 [#allocation2], 4
      %s918 = int_to_ptr.vmem [resolvable:$true] %s917
      %923 = dma.vmem_to_hbm [thread:$0]  %s918, 32, %s2, [#allocation3], 32, 32, 2
    $region13: #{tpu_custom_call.1} parent=1 // pred_fallthru
      _
    // Predicated region
    $region14: #{tpu_custom_call.1} parent=1 // pred_check
      _
    $region15: #{tpu_custom_call.1} parent=1 // pred_check_branch
      %925 = sbr.rel (0) target = $region17
    $region16: #{tpu_custom_call.1} parent=1 // pred_region
      %926 = dma.done [#allocation3], 128
    $region17: #{tpu_custom_call.1} parent=1 // pred_fallthru
      _
    %927 = vsyncpa [#allocation3], 1

</llo_original>
